<compile_context>
chip_gen: v7x
topology: tpu7x:2x2x1
jax: 0.10.0
libtpu: 0.0.40
codegen_flags: <defaults>
</compile_context>

<pallas_src>
import math

import jax
import jax.numpy as jnp
from jax.experimental import pallas as pl
from jax.experimental.pallas import tpu as pltpu


_TARGET_BLOCK_BYTES = 4 * 1024 * 1024   # per-ref block target (post sublane padding)
_VMEM_LIMIT_BYTES = 40 * 1024 * 1024    # 3 refs x 2 bufs x 4 MiB = 24 MiB worst case
_MAX_ROW_TILE = 256                     # multiple of 8/16/32 -> aligned for all dtypes


def make_positional_encoding(d_model: int, window_size: int, dtype=jnp.float32):
    """Sinusoidal PE buffer, shape (1, window_size, d_model); matches the torch ref.

    Build this ONCE at module init with the dtype the activations will use so
    the forward path does not pay a per-call slice / convert.
    """
    position = jnp.arange(window_size, dtype=jnp.float32)[:, None]               # (S, 1)
    div_term = jnp.exp(
        jnp.arange(0, d_model, 2, dtype=jnp.float32) * (-math.log(10000.0) / d_model)
    )                                                                             # (D//2,)
    angles = position * div_term                                                  # (S, D//2)
    # Interleave: even columns <- sin, odd columns <- cos (even d_model, as in torch).
    pe = jnp.stack([jnp.sin(angles), jnp.cos(angles)], axis=-1).reshape(
        window_size, d_model)
    return pe[None, :, :].astype(dtype)                                           # (1, S, D)


def _pe_add_kernel(x_ref, pe_ref, o_ref):
    # Elementwise hot path; pe block has a leading dim of 1 and broadcasts over
    # the batch/row dim of the x block.
    o_ref[...] = x_ref[...] + pe_ref[...]


def _round_up(x: int, m: int) -> int:
    return ((x + m - 1) // m) * m


def _round_down(x: int, m: int) -> int:
    return (x // m) * m


def _sublane_align(itemsize: int) -> int:
    # f32 -> 8, bf16/f16 -> 16, int8/fp8 -> 32 (packed sublane tile).
    return max(8, 32 // itemsize)


def _choose_tiles_2d(B: int, N: int, itemsize: int):
    """Pick (row_tile, col_tile) for x viewed as (B, N), N % 128 == 0.

    Tiles do NOT need to divide B / N; the grid uses pl.cdiv and Pallas drops
    out-of-bounds writes on the ragged last block (safe: pure elementwise).
    """
    sub = _sublane_align(itemsize)
    target_elems = max(128, _TARGET_BLOCK_BYTES // itemsize)

    # Row tile: either the full batch (always a legal block dim) or a fixed
    # aligned size; never degenerates to 1-row tiles for awkward batch sizes.
    row_tile = min(B, _MAX_ROW_TILE)
    padded_rows = _round_up(row_tile, sub)

    # Column tile: lane-dense (multiple of 128), as wide as the byte budget allows.
    col_tile = min(N, max(128, _round_down(target_elems // padded_rows, 128)))

    # If the whole lane axis fits and budget remains, widen the row tile
    # (huge-batch / small-model case) to keep blocks near the target size.
    if col_tile == N and row_tile < B:
        grow = _round_down(target_elems // max(N, 1), sub)
        if grow > row_tile:
            row_tile = min(B, grow)
    return row_tile, col_tile


def _choose_tiles_3d(B: int, S: int, D: int, itemsize: int):
    """Fallback path tiles: (batch_tile, seq_tile) for blocks (bt, s_tile, D).

    Tiling S keeps VMEM bounded for long sequences (v7x has only 64 MiB VMEM).
    """
    sub = _sublane_align(itemsize)
    target_elems = max(1, _TARGET_BLOCK_BYTES // itemsize)
    d_padded = _round_up(D, 128)

    s_cap = max(sub, target_elems // d_padded)
    s_tile = S if S <= s_cap else max(sub, _round_down(s_cap, sub))

    slab_elems = _round_up(s_tile, sub) * d_padded
    bt = max(1, min(B, target_elems // slab_elems))
    return bt, s_tile


def positional_encoding_forward(x: jax.Array, pe: jax.Array, *, donate_x: bool = False):
    """x: (B, S, D); pe: (1, W, D) with W >= S. Returns x + pe[:, :S].

    If `donate_x` is True the output aliases x (in-place add) — only use when
    the caller donates / no longer needs x.
    """
    B, S, D = x.shape
    assert pe.ndim == 3 and pe.shape[0] == 1 and pe.shape[2] == D
    assert pe.shape[1] >= S, "pe window_size must cover the sequence length"

    # Hot path assumes pe was prepared once at init (right length + dtype);
    # only pay the slice / convert if the caller did not.
    if pe.shape[1] != S:
        pe = pe[:, :S, :]
    if pe.dtype != x.dtype:
        # NOTE: rounds pe to x.dtype pre-add (vs torch's promote-then-add);
        # difference is negligible for a fixed sinusoidal buffer.
        pe = pe.astype(x.dtype)

    itemsize = jnp.dtype(x.dtype).itemsize
    N = S * D
    io_alias = {0: 0} if donate_x else {}
    cparams = pltpu.CompilerParams(
        dimension_semantics=("parallel", "parallel"),
        vmem_limit_bytes=_VMEM_LIMIT_BYTES,
    )

    if N % 128 == 0:
        # Lane-dense primary path: collapse (S, D) into a single lane axis so
        # the output last dim is a large multiple of 128 (unmasked stores).
        x2 = x.reshape(B, N)
        pe2 = pe.reshape(1, N)
        row_tile, col_tile = _choose_tiles_2d(B, N, itemsize)
        n_row = pl.cdiv(B, row_tile)
        n_col = pl.cdiv(N, col_tile)

        # Larger axis outermost so the dimension sharded across v7x's two
        # TensorCores has extent >= 2 whenever there is parallel work.
        if n_row >= n_col:
            grid = (n_row, n_col)
            x_map = lambda i, j: (i, j)
            pe_map = lambda i, j: (0, j)
        else:
            grid = (n_col, n_row)
            x_map = lambda j, i: (i, j)
            pe_map = lambda j, i: (0, j)

        out = pl.pallas_call(
            _pe_add_kernel,
            out_shape=jax.ShapeDtypeStruct((B, N), x.dtype),
            grid_spec=pl.GridSpec(
                grid=grid,
                in_specs=[
                    pl.BlockSpec((row_tile, col_tile), x_map),
                    pl.BlockSpec((1, col_tile), pe_map),
                ],
                out_specs=pl.BlockSpec((row_tile, col_tile), x_map),
            ),
            compiler_params=cparams,
            input_output_aliases=io_alias,
        )(x2, pe2)
        return out.reshape(B, S, D)

    # Fallback (S*D not lane-aligned): tile batch AND sequence so block size
    # stays bounded regardless of shape; D stays whole (full-dim block is legal).
    bt, s_tile = _choose_tiles_3d(B, S, D, itemsize)
    n_b = pl.cdiv(B, bt)
    n_s = pl.cdiv(S, s_tile)
    if n_b >= n_s:
        grid = (n_b, n_s)
        x_map = lambda b, s: (b, s, 0)
        pe_map = lambda b, s: (0, s, 0)
    else:
        grid = (n_s, n_b)
        x_map = lambda s, b: (b, s, 0)
        pe_map = lambda s, b: (0, s, 0)

    return pl.pallas_call(
        _pe_add_kernel,
        out_shape=jax.ShapeDtypeStruct((B, S, D), x.dtype),
        grid_spec=pl.GridSpec(
            grid=grid,
            in_specs=[
                pl.BlockSpec((bt, s_tile, D), x_map),
                pl.BlockSpec((1, s_tile, D), pe_map),
            ],
            out_specs=pl.BlockSpec((bt, s_tile, D), x_map),
        ),
        compiler_params=cparams,
        input_output_aliases=io_alias,
    )(x, pe)


if __name__ == "__main__":
    # Small shapes consistent with the module: batch=2, window_size=8, d_model=32.
    batch, window_size, d_model = 2, 8, 32

    key = jax.random.PRNGKey(0)
    x = jax.random.normal(key, (batch, window_size, d_model), dtype=jnp.float32)

    # pe prepared once at "init" with matching length and dtype (hot path).
    pe = make_positional_encoding(d_model, window_size, dtype=x.dtype)

    out = jax.block_until_ready(positional_encoding_forward(x, pe))
    ref = x + pe
    assert out.shape == (batch, window_size, d_model)
    assert jnp.allclose(out, ref, atol=1e-6, rtol=1e-6)

    # Also exercise the non-lane-aligned fallback path (d_model=12 -> S*D=96).
    d2 = 12
    x2 = jax.random.normal(jax.random.PRNGKey(1), (batch, window_size, d2),
                           dtype=jnp.float32)
    pe2 = make_positional_encoding(d2, window_size, dtype=x2.dtype)
    out2 = jax.block_until_ready(positional_encoding_forward(x2, pe2))
    assert jnp.allclose(out2, x2 + pe2, atol=1e-6, rtol=1e-6)

    print("KERNEL_OK")
</pallas_src>

<mosaic_0001>
module attributes {stable_mosaic.version = 11 : i64} {
  func.func @_pe_add_kernel(%arg0: i32, %arg1: i32, %arg2: memref<2x256xf32, #tpu.memory_space<vmem>>, %arg3: memref<1x256xf32, #tpu.memory_space<vmem>>, %arg4: memref<2x256xf32, #tpu.memory_space<vmem>>) attributes {dimension_semantics = [#tpu.dimension_semantics<parallel>, #tpu.dimension_semantics<parallel>], iteration_bounds = array<i64: 1, 1>, scalar_prefetch = 0 : i64, scratch_operands = 0 : i64, tpu.core_type = #tpu.core_type<tc>, window_params = [{transform_indices = @transform_0, window_bounds = array<i64: 2, 256>}, {transform_indices = @transform_1, window_bounds = array<i64: 1, 256>}, {transform_indices = @transform_2, window_bounds = array<i64: 2, 256>}]} {
    %c0 = arith.constant 0 : index
    %c0_0 = arith.constant 0 : index
    %0 = vector.load %arg2[%c0, %c0_0] : memref<2x256xf32, #tpu.memory_space<vmem>>, vector<2x256xf32>
    %c0_1 = arith.constant 0 : index
    %c0_2 = arith.constant 0 : index
    %1 = vector.load %arg3[%c0_1, %c0_2] : memref<1x256xf32, #tpu.memory_space<vmem>>, vector<1x256xf32>
    %2 = vector.broadcast %1 : vector<1x256xf32> to vector<2x256xf32>
    %3 = arith.addf %0, %2 : vector<2x256xf32>
    %c0_3 = arith.constant 0 : index
    %c0_4 = arith.constant 0 : index
    %4 = vector.load %arg4[%c0_3, %c0_4] : memref<2x256xf32, #tpu.memory_space<vmem>>, vector<2x256xf32>
    tpu.vector_store %arg4[%c0_3, %c0_4], %3 {strides = array<i32>} : memref<2x256xf32, #tpu.memory_space<vmem>>, vector<2x256xf32>,
    return
  }
  func.func @transform_0(%arg0: i32, %arg1: i32) -> (i32, i32) {
    %c0_i32 = arith.constant 0 : i32
    return %arg0, %arg1 : i32, i32
  }
  func.func @transform_1(%arg0: i32, %arg1: i32) -> (i32, i32) {
    %c0_i32 = arith.constant 0 : i32
    %c0_i32_0 = arith.constant 0 : i32
    return %c0_i32, %arg1 : i32, i32
  }
  func.func @transform_2(%arg0: i32, %arg1: i32) -> (i32, i32) {
    %c0_i32 = arith.constant 0 : i32
    return %arg0, %arg1 : i32, i32
  }
}

</mosaic_0001>

<llo_original>
// kernel: tpu_custom_call.1
$region0: #{tpu_custom_call.1}
  #allocation0 [shape = 'u32[]', space=smem, size = 0x4, offset = 0x4, fixed_abs, tag = 'smem constant byte address 0x4 - core index']
  #allocation1 [shape = 'u32[144,128]{1,0:T(1,128)}', space=vmem, size = 0x12000, scoped, tag = 'internal scratch']
  %s0 = inlined_call_operand.hbm [shape: f32[2,256], index: 0, kind: input, shape index: {}]
  %s1 = inlined_call_operand.vmem [shape: f32[1,256], index: 1, kind: input, shape index: {}]
  %s2 = inlined_call_operand.hbm [shape: f32[2,256], index: 2, kind: output, shape index: {}]
  %s3 = sld [smem:[#allocation0]]
  $region22: #{tpu_custom_call.1} parent=0
    _
  %s5 = ssub.s32 1, %s3
  %s6 = scalar_select 0, %s5, %s3
  $region1: #{tpu_custom_call.1} parent=0
    #allocation2 [shape = 'u8[2048]{0}', space=vmem, size = 0x800, scoped, tag = 'input window, operand 0, single buffered']
    #allocation3 [shape = 's32[1]{0}', space=sflag, size = 0x4, scoped, tag = 'scoped memory for tpu_custom_call.1']
    #allocation4 [shape = 's32[1]{0}', space=sflag, size = 0x4, scoped, tag = 'scoped memory for tpu_custom_call.1']
    #allocation5 [shape = 'u8[2048]{0}', space=vmem, size = 0x800, scoped, tag = 'output window, operand 0, single buffered']
    %7 = vsyncpa [#allocation3], 0
    %8 = vsyncpa [#allocation4], 0
    // Predicated region
    $region2: #{tpu_custom_call.1} parent=1 // pred_check
      _
    $region3: #{tpu_custom_call.1} parent=1 // pred_check_branch
      %10 = sbr.rel (0) target = $region5
    $region4: #{tpu_custom_call.1} parent=1 // pred_region
      %s12 = ssub.s32 64, 64
      %13 = vsyncadd [#allocation3], %s12
      %s15 = sshll.u32 [#allocation2], 4
      %s16 = int_to_ptr.vmem [resolvable:$true] %s15
      %18 = dma.hbm_to_vmem [thread:$0]  %s0, 64, %s16, [#allocation3]
    $region5: #{tpu_custom_call.1} parent=1 // pred_fallthru
      _
    // Predicated region
    $region6: #{tpu_custom_call.1} parent=1 // pred_check
      _
    $region7: #{tpu_custom_call.1} parent=1 // pred_check_branch
      %20 = sbr.rel (0) target = $region9
    $region8: #{tpu_custom_call.1} parent=1 // pred_region
      _
    $region9: #{tpu_custom_call.1} parent=1 // pred_fallthru
      _
    // Predicated region
    $region10: #{tpu_custom_call.1} parent=1 // pred_check
      _
    $region11: #{tpu_custom_call.1} parent=1 // pred_check_branch
      %22 = sbr.rel (0) target = $region13
    $region12: #{tpu_custom_call.1} parent=1 // pred_region
      %23 = dma.done [#allocation3], 64
    $region13: #{tpu_custom_call.1} parent=1 // pred_fallthru
      _
    %v24 = vld [vmem:[#allocation2] sm:$0xf]
    %v25 = vld [vmem:[%s1] sm:$0x3]
    %v27 = vlaneseq
    %v28 = vshrl.u32 %v27, 7
    %v29 = vsub.s32 0, %v28
    %v30 = vrot.slane %v25, %v29
    %v31 = vlaneseq
    %v32 = vshrl.u32 %v31, 7
    %v33 = vsub.s32 1, %v32
    %v34 = vrot.slane %v25, %v33
    %v35 = vcombine.low %v30, %v34
    %v37 = vunpack.c.l.s4 1983009808
    %v38 = vunpack.c.0.s8 %v37
    %v39 = vlaneseq
    %v40 = vshrl.u32 %v39, 7
    %v41 = vsub.s32 %v38, %v40
    %v42 = vrot.slane %v35, %v41
    %v44 = vadd.f32 %v24, %v42
    %45 = vst [vmem:[#allocation5] sm:$0xf] %v44
    // Predicated region
    $region14: #{tpu_custom_call.1} parent=1 // pred_check
      _
    $region15: #{tpu_custom_call.1} parent=1 // pred_check_branch
      %47 = sbr.rel (0) target = $region17
    $region16: #{tpu_custom_call.1} parent=1 // pred_region
      %s49 = ssub.s32 64, 64
      %50 = vsyncadd [#allocation4], %s49
      %s52 = sshll.u32 [#allocation5], 4
      %s53 = int_to_ptr.vmem [resolvable:$true] %s52
      %55 = dma.vmem_to_hbm [thread:$0]  %s53, 64, %s2, [#allocation4]
    $region17: #{tpu_custom_call.1} parent=1 // pred_fallthru
      _
    // Predicated region
    $region18: #{tpu_custom_call.1} parent=1 // pred_check
      _
    $region19: #{tpu_custom_call.1} parent=1 // pred_check_branch
      %57 = sbr.rel (0) target = $region21
    $region20: #{tpu_custom_call.1} parent=1 // pred_region
      %58 = dma.done [#allocation4], 64
    $region21: #{tpu_custom_call.1} parent=1 // pred_fallthru
      _
    %59 = vsyncpa [#allocation3], 1
    %60 = vsyncpa [#allocation4], 1

</llo_original>
